<compile_context>
chip_gen: v5e
topology: v5e:2x2
jax: 0.10.0
libtpu: 0.0.40
codegen_flags: <defaults>
</compile_context>

<pallas_src>
import functools

import jax
import jax.numpy as jnp
from jax.experimental import pallas as pl
from jax.experimental.pallas import tpu as pltpu


def _round_up(x: int, m: int) -> int:
    return ((x + m - 1) // m) * m


# ---------------------------------------------------------------------------
# Kernel: one batch tile of the fused 3-layer MLP.
# ---------------------------------------------------------------------------
def actor_kernel(x_ref, w1_ref, b1_ref, w2_ref, b2_ref, w3_ref, b3_ref, o_ref):
    # fc1 (bf16 MXU, f32 accumulate) + bias/ReLU in f32
    h1 = jnp.dot(x_ref[...], w1_ref[...], preferred_element_type=jnp.float32)
    h1 = jnp.maximum(h1 + b1_ref[...], 0.0)
    # fc2
    h2 = jnp.dot(h1.astype(jnp.bfloat16), w2_ref[...],
                 preferred_element_type=jnp.float32)
    h2 = jnp.maximum(h2 + b2_ref[...], 0.0)
    # fc3 + tanh (epilogue kept in f32; tanh goes to the EUP slot)
    h3 = jnp.dot(h2.astype(jnp.bfloat16), w3_ref[...],
                 preferred_element_type=jnp.float32)
    o_ref[...] = jnp.tanh(h3 + b3_ref[...]).astype(o_ref.dtype)


# ---------------------------------------------------------------------------
# Wrapper: pad batch, tile it over a 1-D grid, keep weights resident.
# ---------------------------------------------------------------------------
@functools.partial(jax.jit, static_argnames=("nb_actions",))
def actor_forward(x, w1, b1, w2, b2, w3, b3, *, nb_actions):
    B, S = x.shape
    S_pad, H1 = w1.shape          # already padded to multiples of 128
    H2 = w2.shape[1]
    A_pad = w3.shape[1]

    # Batch tile: 256 rows feeds the 256-wide MXU on v6e/v7x; small batches get
    # the minimal 8-row (one f32 sublane group) tile.
    if B >= 256:
        TB = 256
    else:
        TB = max(8, _round_up(B, 8))
    n_tiles = pl.cdiv(B, TB)
    B_pad = n_tiles * TB

    # Zero-pad activations to the padded batch/feature sizes; bf16 for the MXU.
    xp = jnp.pad(x, ((0, B_pad - B), (0, S_pad - S))).astype(jnp.bfloat16)

    out = pl.pallas_call(
        actor_kernel,
        out_shape=jax.ShapeDtypeStruct((B_pad, A_pad), jnp.float32),
        grid=(n_tiles,),
        in_specs=[
            pl.BlockSpec((TB, S_pad), lambda i: (i, 0)),       # x: batch-tiled
            pl.BlockSpec((S_pad, H1), lambda i: (0, 0)),       # weights/biases:
            pl.BlockSpec((1, H1),     lambda i: (0, 0)),       # constant block ->
            pl.BlockSpec((H1, H2),    lambda i: (0, 0)),       # resident in VMEM
            pl.BlockSpec((1, H2),     lambda i: (0, 0)),
            pl.BlockSpec((H2, A_pad), lambda i: (0, 0)),
            pl.BlockSpec((1, A_pad),  lambda i: (0, 0)),
        ],
        out_specs=pl.BlockSpec((TB, A_pad), lambda i: (i, 0)),
        compiler_params=pltpu.CompilerParams(
            dimension_semantics=("parallel",)),                # megacore on v7x
    )(xp, w1, b1, w2, b2, w3, b3)

    return out[:B, :nb_actions]


# ---------------------------------------------------------------------------
# Parameter init mirroring the PyTorch module (then padded / cast for TPU).
# ---------------------------------------------------------------------------
def init_actor_params(key, nb_states, nb_actions, hidden1=400, hidden2=300,
                      init_w=0.003):
    """fanin_init quirk preserved: PyTorch weight is [out, in], so size[0] is
    out_features and the uniform bound is 1/sqrt(out_features) for fc1/fc2.
    Weights are returned transposed to [in, out], zero-padded to multiples of
    128, and cast to bfloat16; biases stay float32 (epilogue runs in f32)."""
    k1, k2, k3, kb1, kb2, kb3 = jax.random.split(key, 6)

    def uniform(k, shape, bound):
        return jax.random.uniform(k, shape, jnp.float32, -bound, bound)

    v1 = 1.0 / jnp.sqrt(hidden1)       # fanin_init uses size[0] = out_features
    v2 = 1.0 / jnp.sqrt(hidden2)

    # Logical [in, out] weights / [1, out] biases.
    w1 = uniform(k1, (nb_states, hidden1), v1)
    w2 = uniform(k2, (hidden1, hidden2), v2)
    w3 = uniform(k3, (hidden2, nb_actions), init_w)
    b1 = uniform(kb1, (1, hidden1), 1.0 / jnp.sqrt(nb_states))
    b2 = uniform(kb2, (1, hidden2), 1.0 / jnp.sqrt(hidden1))
    b3 = uniform(kb3, (1, nb_actions), 1.0 / jnp.sqrt(hidden2))

    S_pad = _round_up(nb_states, 128)
    H1p = _round_up(hidden1, 128)
    H2p = _round_up(hidden2, 128)
    A_pad = _round_up(nb_actions, 128)

    def pad2(a, r, c):
        return jnp.pad(a, ((0, r - a.shape[0]), (0, c - a.shape[1])))

    w1p = pad2(w1, S_pad, H1p).astype(jnp.bfloat16)
    w2p = pad2(w2, H1p, H2p).astype(jnp.bfloat16)
    w3p = pad2(w3, H2p, A_pad).astype(jnp.bfloat16)
    b1p = pad2(b1, 1, H1p)
    b2p = pad2(b2, 1, H2p)
    b3p = pad2(b3, 1, A_pad)

    return w1p, b1p, w2p, b2p, w3p, b3p


# ---------------------------------------------------------------------------
# Pure-JAX reference (same bf16-input / f32-accumulate math as the kernel).
# ---------------------------------------------------------------------------
def actor_forward_ref(x, w1, b1, w2, b2, w3, b3, nb_actions):
    S_pad = w1.shape[0]
    xp = jnp.pad(x, ((0, 0), (0, S_pad - x.shape[1]))).astype(jnp.bfloat16)
    h1 = jnp.maximum(
        jnp.dot(xp, w1, preferred_element_type=jnp.float32) + b1, 0.0)
    h2 = jnp.maximum(
        jnp.dot(h1.astype(jnp.bfloat16), w2,
                preferred_element_type=jnp.float32) + b2, 0.0)
    h3 = jnp.dot(h2.astype(jnp.bfloat16), w3,
                 preferred_element_type=jnp.float32) + b3
    return jnp.tanh(h3)[:, :nb_actions]


if __name__ == "__main__":
    key = jax.random.PRNGKey(0)
    kx, kp = jax.random.split(key)

    batch = 2
    nb_states = 32
    nb_actions = 8
    hidden1 = 400
    hidden2 = 300

    x = jax.random.normal(kx, (batch, nb_states), jnp.float32)
    params = init_actor_params(kp, nb_states, nb_actions, hidden1, hidden2)

    out = actor_forward(x, *params, nb_actions=nb_actions)
    out = jax.block_until_ready(out)

    ref = actor_forward_ref(x, *params, nb_actions)
    assert out.shape == (batch, nb_actions), out.shape
    assert jnp.all(jnp.isfinite(out)), "non-finite output"
    assert jnp.allclose(out, ref, atol=2e-3, rtol=2e-3), "mismatch vs reference"

    print("KERNEL_OK")
</pallas_src>

<mosaic_0001>
module attributes {stable_mosaic.version = 11 : i64} {
  func.func @actor_kernel(%arg0: i32, %arg1: memref<8x128xbf16, #tpu.memory_space<vmem>>, %arg2: memref<128x512xbf16, #tpu.memory_space<vmem>>, %arg3: memref<1x512xf32, #tpu.memory_space<vmem>>, %arg4: memref<512x384xbf16, #tpu.memory_space<vmem>>, %arg5: memref<1x384xf32, #tpu.memory_space<vmem>>, %arg6: memref<384x128xbf16, #tpu.memory_space<vmem>>, %arg7: memref<1x128xf32, #tpu.memory_space<vmem>>, %arg8: memref<8x128xf32, #tpu.memory_space<vmem>>) attributes {dimension_semantics = [#tpu.dimension_semantics<parallel>], iteration_bounds = array<i64: 1>, scalar_prefetch = 0 : i64, scratch_operands = 0 : i64, tpu.core_type = #tpu.core_type<tc>, window_params = [{transform_indices = @transform_0, window_bounds = array<i64: 8, 128>}, {pipeline_mode = #tpu.pipeline_mode<synchronous>, transform_indices = @transform_1, window_bounds = array<i64: 128, 512>}, {pipeline_mode = #tpu.pipeline_mode<synchronous>, transform_indices = @transform_2, window_bounds = array<i64: 1, 512>}, {pipeline_mode = #tpu.pipeline_mode<synchronous>, transform_indices = @transform_3, window_bounds = array<i64: 512, 384>}, {pipeline_mode = #tpu.pipeline_mode<synchronous>, transform_indices = @transform_4, window_bounds = array<i64: 1, 384>}, {pipeline_mode = #tpu.pipeline_mode<synchronous>, transform_indices = @transform_5, window_bounds = array<i64: 384, 128>}, {pipeline_mode = #tpu.pipeline_mode<synchronous>, transform_indices = @transform_6, window_bounds = array<i64: 1, 128>}, {transform_indices = @transform_7, window_bounds = array<i64: 8, 128>}]} {
    %c0 = arith.constant 0 : index
    %c0_0 = arith.constant 0 : index
    %0 = vector.load %arg1[%c0, %c0_0] : memref<8x128xbf16, #tpu.memory_space<vmem>>, vector<8x128xbf16>
    %c0_1 = arith.constant 0 : index
    %c0_2 = arith.constant 0 : index
    %1 = vector.load %arg2[%c0_1, %c0_2] : memref<128x512xbf16, #tpu.memory_space<vmem>>, vector<128x512xbf16>
    %cst = arith.constant dense<0.000000e+00> : vector<8x512xf32>
    %2 = tpu.matmul %0, %1, %cst {dimension_numbers = #tpu.dot_dimension_numbers<[1], [0], [0], [1], [0, 0, 1, 1], [], []>} : vector<8x128xbf16>, vector<128x512xbf16>, vector<8x512xf32> -> vector<8x512xf32>
    %c0_3 = arith.constant 0 : index
    %c0_4 = arith.constant 0 : index
    %3 = vector.load %arg3[%c0_3, %c0_4] : memref<1x512xf32, #tpu.memory_space<vmem>>, vector<1x512xf32>
    %4 = vector.broadcast %3 : vector<1x512xf32> to vector<8x512xf32>
    %5 = arith.addf %2, %4 : vector<8x512xf32>
    %cst_5 = arith.constant 0.000000e+00 : f32
    %6 = vector.broadcast %cst_5 : f32 to vector<8x512xf32>
    %7 = arith.maximumf %5, %6 : vector<8x512xf32>
    %8 = arith.truncf %7 : vector<8x512xf32> to vector<8x512xbf16>
    %c0_6 = arith.constant 0 : index
    %c0_7 = arith.constant 0 : index
    %9 = vector.load %arg4[%c0_6, %c0_7] : memref<512x384xbf16, #tpu.memory_space<vmem>>, vector<512x384xbf16>
    %cst_8 = arith.constant dense<0.000000e+00> : vector<8x384xf32>
    %10 = tpu.matmul %8, %9, %cst_8 {dimension_numbers = #tpu.dot_dimension_numbers<[1], [0], [0], [1], [0, 0, 1, 1], [], []>} : vector<8x512xbf16>, vector<512x384xbf16>, vector<8x384xf32> -> vector<8x384xf32>
    %c0_9 = arith.constant 0 : index
    %c0_10 = arith.constant 0 : index
    %11 = vector.load %arg5[%c0_9, %c0_10] : memref<1x384xf32, #tpu.memory_space<vmem>>, vector<1x384xf32>
    %12 = vector.broadcast %11 : vector<1x384xf32> to vector<8x384xf32>
    %13 = arith.addf %10, %12 : vector<8x384xf32>
    %cst_11 = arith.constant 0.000000e+00 : f32
    %14 = vector.broadcast %cst_11 : f32 to vector<8x384xf32>
    %15 = arith.maximumf %13, %14 : vector<8x384xf32>
    %16 = arith.truncf %15 : vector<8x384xf32> to vector<8x384xbf16>
    %c0_12 = arith.constant 0 : index
    %c0_13 = arith.constant 0 : index
    %17 = vector.load %arg6[%c0_12, %c0_13] : memref<384x128xbf16, #tpu.memory_space<vmem>>, vector<384x128xbf16>
    %cst_14 = arith.constant dense<0.000000e+00> : vector<8x128xf32>
    %18 = tpu.matmul %16, %17, %cst_14 {dimension_numbers = #tpu.dot_dimension_numbers<[1], [0], [0], [1], [0, 0, 1, 1], [], []>} : vector<8x384xbf16>, vector<384x128xbf16>, vector<8x128xf32> -> vector<8x128xf32>
    %c0_15 = arith.constant 0 : index
    %c0_16 = arith.constant 0 : index
    %19 = vector.load %arg7[%c0_15, %c0_16] : memref<1x128xf32, #tpu.memory_space<vmem>>, vector<1x128xf32>
    %20 = vector.broadcast %19 : vector<1x128xf32> to vector<8x128xf32>
    %21 = arith.addf %18, %20 : vector<8x128xf32>
    %22 = math.tanh %21 : vector<8x128xf32>
    %c0_17 = arith.constant 0 : index
    %c0_18 = arith.constant 0 : index
    %23 = vector.load %arg8[%c0_17, %c0_18] : memref<8x128xf32, #tpu.memory_space<vmem>>, vector<8x128xf32>
    tpu.vector_store %arg8[%c0_17, %c0_18], %22 {strides = array<i32>} : memref<8x128xf32, #tpu.memory_space<vmem>>, vector<8x128xf32>,
    return
  }
  func.func @transform_0(%arg0: i32) -> (i32, i32) {
    %c0_i32 = arith.constant 0 : i32
    %c0_i32_0 = arith.constant 0 : i32
    return %arg0, %c0_i32 : i32, i32
  }
  func.func @transform_1(%arg0: i32) -> (i32, i32) {
    %c0_i32 = arith.constant 0 : i32
    %c0_i32_0 = arith.constant 0 : i32
    %c0_i32_1 = arith.constant 0 : i32
    return %c0_i32, %c0_i32_0 : i32, i32
  }
  func.func @transform_2(%arg0: i32) -> (i32, i32) {
    %c0_i32 = arith.constant 0 : i32
    %c0_i32_0 = arith.constant 0 : i32
    %c0_i32_1 = arith.constant 0 : i32
    return %c0_i32, %c0_i32_0 : i32, i32
  }
  func.func @transform_3(%arg0: i32) -> (i32, i32) {
    %c0_i32 = arith.constant 0 : i32
    %c0_i32_0 = arith.constant 0 : i32
    %c0_i32_1 = arith.constant 0 : i32
    return %c0_i32, %c0_i32_0 : i32, i32
  }
  func.func @transform_4(%arg0: i32) -> (i32, i32) {
    %c0_i32 = arith.constant 0 : i32
    %c0_i32_0 = arith.constant 0 : i32
    %c0_i32_1 = arith.constant 0 : i32
    return %c0_i32, %c0_i32_0 : i32, i32
  }
  func.func @transform_5(%arg0: i32) -> (i32, i32) {
    %c0_i32 = arith.constant 0 : i32
    %c0_i32_0 = arith.constant 0 : i32
    %c0_i32_1 = arith.constant 0 : i32
    return %c0_i32, %c0_i32_0 : i32, i32
  }
  func.func @transform_6(%arg0: i32) -> (i32, i32) {
    %c0_i32 = arith.constant 0 : i32
    %c0_i32_0 = arith.constant 0 : i32
    %c0_i32_1 = arith.constant 0 : i32
    return %c0_i32, %c0_i32_0 : i32, i32
  }
  func.func @transform_7(%arg0: i32) -> (i32, i32) {
    %c0_i32 = arith.constant 0 : i32
    %c0_i32_0 = arith.constant 0 : i32
    return %arg0, %c0_i32 : i32, i32
  }
}

</mosaic_0001>

<llo_original>
// kernel: actor_forward.1
$region0: #{actor_forward.1}
  #allocation0 [shape = 'u32[]', space=smem, size = 0x4, offset = 0x4, fixed_abs, tag = 'smem constant byte address 0x4 - core index']
  #allocation1 [shape = 'u32[72,128]{1,0:T(1,128)}', space=vmem, size = 0x9000, scoped, tag = 'internal scratch']
  %s0 = inlined_call_operand.vmem [shape: bf16[8,128], index: 0, kind: input, shape index: {}]
  %s1 = inlined_call_operand.hbm [shape: bf16[128,512], index: 1, kind: input, shape index: {}]
  %s2 = inlined_call_operand.vmem [shape: f32[1,512], index: 2, kind: input, shape index: {}]
  %s3 = inlined_call_operand.hbm [shape: bf16[512,384], index: 3, kind: input, shape index: {}]
  %s4 = inlined_call_operand.vmem [shape: f32[1,384], index: 4, kind: input, shape index: {}]
  %s5 = inlined_call_operand.hbm [shape: bf16[384,128], index: 5, kind: input, shape index: {}]
  %s6 = inlined_call_operand.vmem [shape: f32[1,128], index: 6, kind: input, shape index: {}]
  %s7 = inlined_call_operand.vmem [shape: f32[8,128], index: 7, kind: output, shape index: {}]
  %s8 = sld [smem:[#allocation0]]
  $region50: #{actor_forward.1} parent=0
    _
  %s10 = ssub.s32 1, %s8
  %s11 = scalar_select 0, %s10, %s8
  $region1: #{actor_forward.1} parent=0
    #allocation2 [shape = 'u8[131072]{0}', space=vmem, size = 0x20000, scoped, tag = 'input window, operand 1, single buffered']
    #allocation3 [shape = 's32[1]{0}', space=sflag, size = 0x4, scoped, tag = 'scoped memory for actor_forward.1']
    #allocation4 [shape = 'u8[393216]{0}', space=vmem, size = 0x60000, scoped, tag = 'input window, operand 3, single buffered']
    #allocation5 [shape = 's32[1]{0}', space=sflag, size = 0x4, scoped, tag = 'scoped memory for actor_forward.1']
    #allocation6 [shape = 'u8[98304]{0}', space=vmem, size = 0x18000, scoped, tag = 'input window, operand 5, single buffered']
    %12 = vsyncpa [#allocation3], 0
    %13 = vsyncpa [#allocation5], 0
    // Predicated region
    $region2: #{actor_forward.1} parent=1 // pred_check
      _
    $region3: #{actor_forward.1} parent=1 // pred_check_branch
      %15 = sbr.rel (0) target = $region5
    $region4: #{actor_forward.1} parent=1 // pred_region
      _
    $region5: #{actor_forward.1} parent=1 // pred_fallthru
      _
    // Predicated region
    $region6: #{actor_forward.1} parent=1 // pred_check
      _
    $region7: #{actor_forward.1} parent=1 // pred_check_branch
      %17 = sbr.rel (0) target = $region9
    $region8: #{actor_forward.1} parent=1 // pred_region
      %19 = vsyncadd [#allocation3], 0
      %s20 = sshll.u32 %s1, 4
      %s21 = int_to_ptr.hbm [resolvable:$true] %s20
      %s22 = sshll.u32 [#allocation2], 4
      %s23 = int_to_ptr.vmem [resolvable:$true] %s22
      %28 = dma.hbm_to_vmem [thread:$0]  %s21, 4096, %s23, [#allocation3], 256, 256, 16
    $region9: #{actor_forward.1} parent=1 // pred_fallthru
      _
    // Predicated region
    $region10: #{actor_forward.1} parent=1 // pred_check
      _
    $region11: #{actor_forward.1} parent=1 // pred_check_branch
      %30 = sbr.rel (0) target = $region13
    $region12: #{actor_forward.1} parent=1 // pred_region
      _
    $region13: #{actor_forward.1} parent=1 // pred_fallthru
      _
    // Predicated region
    $region14: #{actor_forward.1} parent=1 // pred_check
      _
    $region15: #{actor_forward.1} parent=1 // pred_check_branch
      %32 = sbr.rel (0) target = $region17
    $region16: #{actor_forward.1} parent=1 // pred_region
      %34 = vsyncadd [#allocation5], 0
      %s35 = sshll.u32 %s3, 4
      %s36 = int_to_ptr.hbm [resolvable:$true] %s35
      %s37 = sshll.u32 [#allocation4], 4
      %s38 = int_to_ptr.vmem [resolvable:$true] %s37
      %43 = dma.hbm_to_vmem [thread:$0]  %s36, 12288, %s38, [#allocation5], 192, 192, 12
    $region17: #{actor_forward.1} parent=1 // pred_fallthru
      _
    // Predicated region
    $region18: #{actor_forward.1} parent=1 // pred_check
      _
    $region19: #{actor_forward.1} parent=1 // pred_check_branch
      %45 = sbr.rel (0) target = $region21
    $region20: #{actor_forward.1} parent=1 // pred_region
      _
    $region21: #{actor_forward.1} parent=1 // pred_fallthru
      _
    // Predicated region
    $region22: #{actor_forward.1} parent=1 // pred_check
      _
    $region23: #{actor_forward.1} parent=1 // pred_check_branch
      %47 = sbr.rel (0) target = $region25
    $region24: #{actor_forward.1} parent=1 // pred_region
      %49 = vsyncadd [#allocation5], 0
      %s50 = sshll.u32 %s5, 4
      %s51 = int_to_ptr.hbm [resolvable:$true] %s50
      %s52 = sshll.u32 [#allocation6], 4
      %s53 = int_to_ptr.vmem [resolvable:$true] %s52
      %58 = dma.hbm_to_vmem [thread:$0]  %s51, 3072, %s53, [#allocation5], 64, 64, 4
    $region25: #{actor_forward.1} parent=1 // pred_fallthru
      _
    // Predicated region
    $region26: #{actor_forward.1} parent=1 // pred_check
      _
    $region27: #{actor_forward.1} parent=1 // pred_check_branch
      %60 = sbr.rel (0) target = $region29
    $region28: #{actor_forward.1} parent=1 // pred_region
      _
    $region29: #{actor_forward.1} parent=1 // pred_fallthru
      _
    // Predicated region
    $region30: #{actor_forward.1} parent=1 // pred_check
      _
    $region31: #{actor_forward.1} parent=1 // pred_check_branch
      %62 = sbr.rel (0) target = $region33
    $region32: #{actor_forward.1} parent=1 // pred_region
      %64 = dma.done [#allocation3], 4096
    $region33: #{actor_forward.1} parent=1 // pred_fallthru
      _
    // Predicated region
    $region34: #{actor_forward.1} parent=1 // pred_check
      _
    $region35: #{actor_forward.1} parent=1 // pred_check_branch
      %66 = sbr.rel (0) target = $region37
    $region36: #{actor_forward.1} parent=1 // pred_region
      %68 = dma.done [#allocation5], 12288
    $region37: #{actor_forward.1} parent=1 // pred_fallthru
      _
    // Predicated region
    $region38: #{actor_forward.1} parent=1 // pred_check
      _
    $region39: #{actor_forward.1} parent=1 // pred_check_branch
      %70 = sbr.rel (0) target = $region41
    $region40: #{actor_forward.1} parent=1 // pred_region
      %72 = dma.done [#allocation5], 3072
    $region41: #{actor_forward.1} parent=1 // pred_fallthru
      _
    %v73 = vld [vmem:[%s0] sm:$0xf]
    %v74 = vld [vmem:[#allocation2] sm:$0xff]
    %v75 = vld [vmem:[#allocation2 + $0x8] sm:$0xff]
    %v76 = vld [vmem:[#allocation2 + $0x10] sm:$0xff]
    %v77 = vld [vmem:[#allocation2 + $0x18] sm:$0xff]
    %v78 = vld [vmem:[#allocation2 + $0x20] sm:$0xff]
    %v79 = vld [vmem:[#allocation2 + $0x28] sm:$0xff]
    %v80 = vld [vmem:[#allocation2 + $0x30] sm:$0xff]
    %v81 = vld [vmem:[#allocation2 + $0x38] sm:$0xff]
    %v82 = vld [vmem:[#allocation2 + $0x40] sm:$0xff]
    %v83 = vld [vmem:[#allocation2 + $0x48] sm:$0xff]
    %v84 = vld [vmem:[#allocation2 + $0x50] sm:$0xff]
    %v85 = vld [vmem:[#allocation2 + $0x58] sm:$0xff]
    %v86 = vld [vmem:[#allocation2 + $0x60] sm:$0xff]
    %v87 = vld [vmem:[#allocation2 + $0x68] sm:$0xff]
    %v88 = vld [vmem:[#allocation2 + $0x70] sm:$0xff]
    %v89 = vld [vmem:[#allocation2 + $0x78] sm:$0xff]
    %v90 = vld [vmem:[#allocation2 + $0x80] sm:$0xff]
    %v91 = vld [vmem:[#allocation2 + $0x88] sm:$0xff]
    %v92 = vld [vmem:[#allocation2 + $0x90] sm:$0xff]
    %v93 = vld [vmem:[#allocation2 + $0x98] sm:$0xff]
    %v94 = vld [vmem:[#allocation2 + $0xa0] sm:$0xff]
    %v95 = vld [vmem:[#allocation2 + $0xa8] sm:$0xff]
    %v96 = vld [vmem:[#allocation2 + $0xb0] sm:$0xff]
    %v97 = vld [vmem:[#allocation2 + $0xb8] sm:$0xff]
    %v98 = vld [vmem:[#allocation2 + $0xc0] sm:$0xff]
    %v99 = vld [vmem:[#allocation2 + $0xc8] sm:$0xff]
    %v100 = vld [vmem:[#allocation2 + $0xd0] sm:$0xff]
    %v101 = vld [vmem:[#allocation2 + $0xd8] sm:$0xff]
    %v102 = vld [vmem:[#allocation2 + $0xe0] sm:$0xff]
    %v103 = vld [vmem:[#allocation2 + $0xe8] sm:$0xff]
    %v104 = vld [vmem:[#allocation2 + $0xf0] sm:$0xff]
    %v105 = vld [vmem:[#allocation2 + $0xf8] sm:$0xff]
    %v106 = vld [vmem:[%s2] sm:$0xf]
    %v108 = vperm.slane %v106, 0
    %v109 = vperm.slane %v106, 1
    %v110 = vperm.slane %v106, 2
    %v111 = vperm.slane %v106, 3
    %v148 = vunpack.c.l.b16 %v74
    %v149 = vunpack.c.h.b16 %v74
    %v150 = vunpack.c.l.b16 %v75
    %v151 = vunpack.c.h.b16 %v75
    %v152 = vunpack.c.l.b16 %v76
    %v153 = vunpack.c.h.b16 %v76
    %v154 = vunpack.c.l.b16 %v77
    %v155 = vunpack.c.h.b16 %v77
    %v156 = vunpack.c.l.b16 %v78
    %v157 = vunpack.c.h.b16 %v78
    %v158 = vunpack.c.l.b16 %v79
    %v159 = vunpack.c.h.b16 %v79
    %v160 = vunpack.c.l.b16 %v80
    %v161 = vunpack.c.h.b16 %v80
    %v162 = vunpack.c.l.b16 %v81
    %v163 = vunpack.c.h.b16 %v81
    %v164 = vunpack.c.l.b16 %v82
    %v165 = vunpack.c.h.b16 %v82
    %v166 = vunpack.c.l.b16 %v83
    %v167 = vunpack.c.h.b16 %v83
    %v168 = vunpack.c.l.b16 %v84
    %v169 = vunpack.c.h.b16 %v84
    %v170 = vunpack.c.l.b16 %v85
    %v171 = vunpack.c.h.b16 %v85
    %v172 = vunpack.c.l.b16 %v86
    %v173 = vunpack.c.h.b16 %v86
    %v174 = vunpack.c.l.b16 %v87
    %v175 = vunpack.c.h.b16 %v87
    %v176 = vunpack.c.l.b16 %v88
    %v177 = vunpack.c.h.b16 %v88
    %v178 = vunpack.c.l.b16 %v89
    %v179 = vunpack.c.h.b16 %v89
    %v180 = vunpack.c.l.b16 %v90
    %v181 = vunpack.c.h.b16 %v90
    %v182 = vunpack.c.l.b16 %v91
    %v183 = vunpack.c.h.b16 %v91
    %v184 = vunpack.c.l.b16 %v92
    %v185 = vunpack.c.h.b16 %v92
    %v186 = vunpack.c.l.b16 %v93
    %v187 = vunpack.c.h.b16 %v93
    %v188 = vunpack.c.l.b16 %v94
    %v189 = vunpack.c.h.b16 %v94
    %v190 = vunpack.c.l.b16 %v95
    %v191 = vunpack.c.h.b16 %v95
    %v192 = vunpack.c.l.b16 %v96
    %v193 = vunpack.c.h.b16 %v96
    %v194 = vunpack.c.l.b16 %v97
    %v195 = vunpack.c.h.b16 %v97
    %v196 = vunpack.c.l.b16 %v98
    %v197 = vunpack.c.h.b16 %v98
    %v198 = vunpack.c.l.b16 %v99
    %v199 = vunpack.c.h.b16 %v99
    %v200 = vunpack.c.l.b16 %v100
    %v201 = vunpack.c.h.b16 %v100
    %v202 = vunpack.c.l.b16 %v101
    %v203 = vunpack.c.h.b16 %v101
    %v204 = vunpack.c.l.b16 %v102
    %v205 = vunpack.c.h.b16 %v102
    %v206 = vunpack.c.l.b16 %v103
    %v207 = vunpack.c.h.b16 %v103
    %v208 = vunpack.c.l.b16 %v104
    %v209 = vunpack.c.h.b16 %v104
    %v210 = vunpack.c.l.b16 %v105
    %v211 = vunpack.c.h.b16 %v105
    %v212 = vpack.c.b16 %v152, %v148
    %v213 = vpack.c.b16 %v153, %v149
    %v214 = vpack.c.b16 %v154, %v150
    %v215 = vpack.c.b16 %v155, %v151
    %v216 = vpack.c.b16 %v160, %v156
    %v217 = vpack.c.b16 %v161, %v157
    %v218 = vpack.c.b16 %v162, %v158
    %v219 = vpack.c.b16 %v163, %v159
    %v220 = vpack.c.b16 %v168, %v164
    %v221 = vpack.c.b16 %v169, %v165
    %v222 = vpack.c.b16 %v170, %v166
    %v223 = vpack.c.b16 %v171, %v167
    %v224 = vpack.c.b16 %v176, %v172
    %v225 = vpack.c.b16 %v177, %v173
    %v226 = vpack.c.b16 %v178, %v174
    %v227 = vpack.c.b16 %v179, %v175
    %v228 = vpack.c.b16 %v184, %v180
    %v229 = vpack.c.b16 %v185, %v181
    %v230 = vpack.c.b16 %v186, %v182
    %v231 = vpack.c.b16 %v187, %v183
    %v232 = vpack.c.b16 %v192, %v188
    %v233 = vpack.c.b16 %v193, %v189
    %v234 = vpack.c.b16 %v194, %v190
    %v235 = vpack.c.b16 %v195, %v191
    %v236 = vpack.c.b16 %v200, %v196
    %v237 = vpack.c.b16 %v201, %v197
    %v238 = vpack.c.b16 %v202, %v198
    %v239 = vpack.c.b16 %v203, %v199
    %v240 = vpack.c.b16 %v208, %v204
    %v241 = vpack.c.b16 %v209, %v205
    %v242 = vpack.c.b16 %v210, %v206
    %v243 = vpack.c.b16 %v211, %v207
    %276 = vmatpush.bf16.msra.mxu0 %v240
    %277 = vmatpush.bf16.msra.mxu0 %v236
    %278 = vmatpush.bf16.msra.mxu0 %v232
    %279 = vmatpush.bf16.msra.mxu0 %v228
    %280 = vmatpush.bf16.msra.mxu0 %v224
    %281 = vmatpush.bf16.msra.mxu0 %v220
    %282 = vmatpush.bf16.msra.mxu0 %v216
    %283 = vmatpush.bf16.msra.mxu0 %v212
    %284 = vmatmul.bf16.gmra.mxu0 %v73
    %v285 = vpop.f32.mrf.mxu0
    %v286 = vadd.f32 %v108, %v285
    %v287 = vpop.f32.mrf.mxu0
    %288 = vdwg.mxu0
    %289 = vmatpush.bf16.msra.mxu0 %v241
    %290 = vmatpush.bf16.msra.mxu0 %v237
    %291 = vmatpush.bf16.msra.mxu0 %v233
    %292 = vmatpush.bf16.msra.mxu0 %v229
    %293 = vmatpush.bf16.msra.mxu0 %v225
    %294 = vmatpush.bf16.msra.mxu0 %v221
    %295 = vmatpush.bf16.msra.mxu0 %v217
    %296 = vmatpush.bf16.msra.mxu0 %v213
    %297 = vmatmul.bf16.gmra.mxu0 %v73
    %v298 = vpop.f32.mrf.mxu0
    %v299 = vadd.f32 %v109, %v298
    %v300 = vpop.f32.mrf.mxu0
    %301 = vdwg.mxu0
    %302 = vmatpush.bf16.msra.mxu0 %v242
    %303 = vmatpush.bf16.msra.mxu0 %v238
    %304 = vmatpush.bf16.msra.mxu0 %v234
    %305 = vmatpush.bf16.msra.mxu0 %v230
    %306 = vmatpush.bf16.msra.mxu0 %v226
    %307 = vmatpush.bf16.msra.mxu0 %v222
    %308 = vmatpush.bf16.msra.mxu0 %v218
    %309 = vmatpush.bf16.msra.mxu0 %v214
    %310 = vmatmul.bf16.gmra.mxu0 %v73
    %v311 = vpop.f32.mrf.mxu0
    %v312 = vadd.f32 %v110, %v311
    %v313 = vpop.f32.mrf.mxu0
    %314 = vdwg.mxu0
    %315 = vmatpush.bf16.msra.mxu0 %v243
    %316 = vmatpush.bf16.msra.mxu0 %v239
    %317 = vmatpush.bf16.msra.mxu0 %v235
    %318 = vmatpush.bf16.msra.mxu0 %v231
    %319 = vmatpush.bf16.msra.mxu0 %v227
    %320 = vmatpush.bf16.msra.mxu0 %v223
    %321 = vmatpush.bf16.msra.mxu0 %v219
    %322 = vmatpush.bf16.msra.mxu0 %v215
    %323 = vmatmul.bf16.gmra.mxu0 %v73
    %v324 = vpop.f32.mrf.mxu0
    %v325 = vadd.f32 %v111, %v324
    %v326 = vpop.f32.mrf.mxu0
    %327 = vdwg.mxu0
    %v328 = vmax.f32 %v286, 0.0
    %v329 = vmax.f32 %v299, 0.0
    %v330 = vmax.f32 %v312, 0.0
    %v331 = vmax.f32 %v325, 0.0
    %v332 = vpack.c.bf16 %v328, %v328
    %v333 = vpack.c.bf16 %v329, %v329
    %v334 = vpack.c.bf16 %v330, %v330
    %v335 = vpack.c.bf16 %v331, %v331
    %v336 = vld [vmem:[#allocation4] sm:$0xff]
    %v337 = vld [vmem:[#allocation4 + $0x8] sm:$0xf]
    %v338 = vld [vmem:[#allocation4 + $0xc] sm:$0xff]
    %v339 = vld [vmem:[#allocation4 + $0x14] sm:$0xf]
    %v340 = vld [vmem:[#allocation4 + $0x18] sm:$0xff]
    %v341 = vld [vmem:[#allocation4 + $0x20] sm:$0xf]
    %v342 = vld [vmem:[#allocation4 + $0x24] sm:$0xff]
    %v343 = vld [vmem:[#allocation4 + $0x2c] sm:$0xf]
    %v344 = vld [vmem:[#allocation4 + $0x30] sm:$0xff]
    %v345 = vld [vmem:[#allocation4 + $0x38] sm:$0xf]
    %v346 = vld [vmem:[#allocation4 + $0x3c] sm:$0xff]
    %v347 = vld [vmem:[#allocation4 + $0x44] sm:$0xf]
    %v348 = vld [vmem:[#allocation4 + $0x48] sm:$0xff]
    %v349 = vld [vmem:[#allocation4 + $0x50] sm:$0xf]
    %v350 = vld [vmem:[#allocation4 + $0x54] sm:$0xff]
    %v351 = vld [vmem:[#allocation4 + $0x5c] sm:$0xf]
    %v352 = vld [vmem:[#allocation4 + $0x60] sm:$0xff]
    %v353 = vld [vmem:[#allocation4 + $0x68] sm:$0xf]
    %v354 = vld [vmem:[#allocation4 + $0x6c] sm:$0xff]
    %v355 = vld [vmem:[#allocation4 + $0x74] sm:$0xf]
    %v356 = vld [vmem:[#allocation4 + $0x78] sm:$0xff]
    %v357 = vld [vmem:[#allocation4 + $0x80] sm:$0xf]
    %v358 = vld [vmem:[#allocation4 + $0x84] sm:$0xff]
    %v359 = vld [vmem:[#allocation4 + $0x8c] sm:$0xf]
    %v360 = vld [vmem:[#allocation4 + $0x90] sm:$0xff]
    %v361 = vld [vmem:[#allocation4 + $0x98] sm:$0xf]
    %v362 = vld [vmem:[#allocation4 + $0x9c] sm:$0xff]
    %v363 = vld [vmem:[#allocation4 + $0xa4] sm:$0xf]
    %v364 = vld [vmem:[#allocation4 + $0xa8] sm:$0xff]
    %v365 = vld [vmem:[#allocation4 + $0xb0] sm:$0xf]
    %v366 = vld [vmem:[#allocation4 + $0xb4] sm:$0xff]
    %v367 = vld [vmem:[#allocation4 + $0xbc] sm:$0xf]
    %v368 = vld [vmem:[#allocation4 + $0xc0] sm:$0xff]
    %v369 = vld [vmem:[#allocation4 + $0xc8] sm:$0xf]
    %v370 = vld [vmem:[#allocation4 + $0xcc] sm:$0xff]
    %v371 = vld [vmem:[#allocation4 + $0xd4] sm:$0xf]
    %v372 = vld [vmem:[#allocation4 + $0xd8] sm:$0xff]
    %v373 = vld [vmem:[#allocation4 + $0xe0] sm:$0xf]
    %v374 = vld [vmem:[#allocation4 + $0xe4] sm:$0xff]
    %v375 = vld [vmem:[#allocation4 + $0xec] sm:$0xf]
    %v376 = vld [vmem:[#allocation4 + $0xf0] sm:$0xff]
    %v377 = vld [vmem:[#allocation4 + $0xf8] sm:$0xf]
    %v378 = vld [vmem:[#allocation4 + $0xfc] sm:$0xff]
    %v379 = vld [vmem:[#allocation4 + $0x104] sm:$0xf]
    %v380 = vld [vmem:[#allocation4 + $0x108] sm:$0xff]
    %v381 = vld [vmem:[#allocation4 + $0x110] sm:$0xf]
    %v382 = vld [vmem:[#allocation4 + $0x114] sm:$0xff]
    %v383 = vld [vmem:[#allocation4 + $0x11c] sm:$0xf]
    %v384 = vld [vmem:[#allocation4 + $0x120] sm:$0xff]
    %v385 = vld [vmem:[#allocation4 + $0x128] sm:$0xf]
    %v386 = vld [vmem:[#allocation4 + $0x12c] sm:$0xff]
    %v387 = vld [vmem:[#allocation4 + $0x134] sm:$0xf]
    %v388 = vld [vmem:[#allocation4 + $0x138] sm:$0xff]
    %v389 = vld [vmem:[#allocation4 + $0x140] sm:$0xf]
    %v390 = vld [vmem:[#allocation4 + $0x144] sm:$0xff]
    %v391 = vld [vmem:[#allocation4 + $0x14c] sm:$0xf]
    %v392 = vld [vmem:[#allocation4 + $0x150] sm:$0xff]
    %v393 = vld [vmem:[#allocation4 + $0x158] sm:$0xf]
    %v394 = vld [vmem:[#allocation4 + $0x15c] sm:$0xff]
    %v395 = vld [vmem:[#allocation4 + $0x164] sm:$0xf]
    %v396 = vld [vmem:[#allocation4 + $0x168] sm:$0xff]
    %v397 = vld [vmem:[#allocation4 + $0x170] sm:$0xf]
    %v398 = vld [vmem:[#allocation4 + $0x174] sm:$0xff]
    %v399 = vld [vmem:[#allocation4 + $0x17c] sm:$0xf]
    %v400 = vld [vmem:[#allocation4 + $0x180] sm:$0xff]
    %v401 = vld [vmem:[#allocation4 + $0x188] sm:$0xf]
    %v402 = vld [vmem:[#allocation4 + $0x18c] sm:$0xff]
    %v403 = vld [vmem:[#allocation4 + $0x194] sm:$0xf]
    %v404 = vld [vmem:[#allocation4 + $0x198] sm:$0xff]
    %v405 = vld [vmem:[#allocation4 + $0x1a0] sm:$0xf]
    %v406 = vld [vmem:[#allocation4 + $0x1a4] sm:$0xff]
    %v407 = vld [vmem:[#allocation4 + $0x1ac] sm:$0xf]
    %v408 = vld [vmem:[#allocation4 + $0x1b0] sm:$0xff]
    %v409 = vld [vmem:[#allocation4 + $0x1b8] sm:$0xf]
    %v410 = vld [vmem:[#allocation4 + $0x1bc] sm:$0xff]
    %v411 = vld [vmem:[#allocation4 + $0x1c4] sm:$0xf]
    %v412 = vld [vmem:[#allocation4 + $0x1c8] sm:$0xff]
    %v413 = vld [vmem:[#allocation4 + $0x1d0] sm:$0xf]
    %v414 = vld [vmem:[#allocation4 + $0x1d4] sm:$0xff]
    %v415 = vld [vmem:[#allocation4 + $0x1dc] sm:$0xf]
    %v416 = vld [vmem:[#allocation4 + $0x1e0] sm:$0xff]
    %v417 = vld [vmem:[#allocation4 + $0x1e8] sm:$0xf]
    %v418 = vld [vmem:[#allocation4 + $0x1ec] sm:$0xff]
    %v419 = vld [vmem:[#allocation4 + $0x1f4] sm:$0xf]
    %v420 = vld [vmem:[#allocation4 + $0x1f8] sm:$0xff]
    %v421 = vld [vmem:[#allocation4 + $0x200] sm:$0xf]
    %v422 = vld [vmem:[#allocation4 + $0x204] sm:$0xff]
    %v423 = vld [vmem:[#allocation4 + $0x20c] sm:$0xf]
    %v424 = vld [vmem:[#allocation4 + $0x210] sm:$0xff]
    %v425 = vld [vmem:[#allocation4 + $0x218] sm:$0xf]
    %v426 = vld [vmem:[#allocation4 + $0x21c] sm:$0xff]
    %v427 = vld [vmem:[#allocation4 + $0x224] sm:$0xf]
    %v428 = vld [vmem:[#allocation4 + $0x228] sm:$0xff]
    %v429 = vld [vmem:[#allocation4 + $0x230] sm:$0xf]
    %v430 = vld [vmem:[#allocation4 + $0x234] sm:$0xff]
    %v431 = vld [vmem:[#allocation4 + $0x23c] sm:$0xf]
    %v432 = vld [vmem:[#allocation4 + $0x240] sm:$0xff]
    %v433 = vld [vmem:[#allocation4 + $0x248] sm:$0xf]
    %v434 = vld [vmem:[#allocation4 + $0x24c] sm:$0xff]
    %v435 = vld [vmem:[#allocation4 + $0x254] sm:$0xf]
    %v436 = vld [vmem:[#allocation4 + $0x258] sm:$0xff]
    %v437 = vld [vmem:[#allocation4 + $0x260] sm:$0xf]
    %v438 = vld [vmem:[#allocation4 + $0x264] sm:$0xff]
    %v439 = vld [vmem:[#allocation4 + $0x26c] sm:$0xf]
    %v440 = vld [vmem:[#allocation4 + $0x270] sm:$0xff]
    %v441 = vld [vmem:[#allocation4 + $0x278] sm:$0xf]
    %v442 = vld [vmem:[#allocation4 + $0x27c] sm:$0xff]
    %v443 = vld [vmem:[#allocation4 + $0x284] sm:$0xf]
    %v444 = vld [vmem:[#allocation4 + $0x288] sm:$0xff]
    %v445 = vld [vmem:[#allocation4 + $0x290] sm:$0xf]
    %v446 = vld [vmem:[#allocation4 + $0x294] sm:$0xff]
    %v447 = vld [vmem:[#allocation4 + $0x29c] sm:$0xf]
    %v448 = vld [vmem:[#allocation4 + $0x2a0] sm:$0xff]
    %v449 = vld [vmem:[#allocation4 + $0x2a8] sm:$0xf]
    %v450 = vld [vmem:[#allocation4 + $0x2ac] sm:$0xff]
    %v451 = vld [vmem:[#allocation4 + $0x2b4] sm:$0xf]
    %v452 = vld [vmem:[#allocation4 + $0x2b8] sm:$0xff]
    %v453 = vld [vmem:[#allocation4 + $0x2c0] sm:$0xf]
    %v454 = vld [vmem:[#allocation4 + $0x2c4] sm:$0xff]
    %v455 = vld [vmem:[#allocation4 + $0x2cc] sm:$0xf]
    %v456 = vld [vmem:[#allocation4 + $0x2d0] sm:$0xff]
    %v457 = vld [vmem:[#allocation4 + $0x2d8] sm:$0xf]
    %v458 = vld [vmem:[#allocation4 + $0x2dc] sm:$0xff]
    %v459 = vld [vmem:[#allocation4 + $0x2e4] sm:$0xf]
    %v460 = vld [vmem:[#allocation4 + $0x2e8] sm:$0xff]
    %v461 = vld [vmem:[#allocation4 + $0x2f0] sm:$0xf]
    %v462 = vld [vmem:[#allocation4 + $0x2f4] sm:$0xff]
    %v463 = vld [vmem:[#allocation4 + $0x2fc] sm:$0xf]
    %v464 = vld [vmem:[%s4] sm:$0x7]
    %v466 = vperm.slane %v464, 0
    %v467 = vperm.slane %v464, 1
    %v468 = vperm.slane %v464, 2
    %v600 = vunpack.c.l.b16 %v336
    %v601 = vunpack.c.h.b16 %v336
    %v602 = vunpack.c.l.b16 %v337
    %v603 = vunpack.c.l.b16 %v338
    %v604 = vunpack.c.h.b16 %v338
    %v605 = vunpack.c.l.b16 %v339
    %v606 = vunpack.c.l.b16 %v340
    %v607 = vunpack.c.h.b16 %v340
    %v608 = vunpack.c.l.b16 %v341
    %v609 = vunpack.c.l.b16 %v342
    %v610 = vunpack.c.h.b16 %v342
    %v611 = vunpack.c.l.b16 %v343
    %v612 = vunpack.c.l.b16 %v344
    %v613 = vunpack.c.h.b16 %v344
    %v614 = vunpack.c.l.b16 %v345
    %v615 = vunpack.c.l.b16 %v346
    %v616 = vunpack.c.h.b16 %v346
    %v617 = vunpack.c.l.b16 %v347
    %v618 = vunpack.c.l.b16 %v348
    %v619 = vunpack.c.h.b16 %v348
    %v620 = vunpack.c.l.b16 %v349
    %v621 = vunpack.c.l.b16 %v350
    %v622 = vunpack.c.h.b16 %v350
    %v623 = vunpack.c.l.b16 %v351
    %v624 = vunpack.c.l.b16 %v352
    %v625 = vunpack.c.h.b16 %v352
    %v626 = vunpack.c.l.b16 %v353
    %v627 = vunpack.c.l.b16 %v354
    %v628 = vunpack.c.h.b16 %v354
    %v629 = vunpack.c.l.b16 %v355
    %v630 = vunpack.c.l.b16 %v356
    %v631 = vunpack.c.h.b16 %v356
    %v632 = vunpack.c.l.b16 %v357
    %v633 = vunpack.c.l.b16 %v358
    %v634 = vunpack.c.h.b16 %v358
    %v635 = vunpack.c.l.b16 %v359
    %v636 = vunpack.c.l.b16 %v360
    %v637 = vunpack.c.h.b16 %v360
    %v638 = vunpack.c.l.b16 %v361
    %v639 = vunpack.c.l.b16 %v362
    %v640 = vunpack.c.h.b16 %v362
    %v641 = vunpack.c.l.b16 %v363
    %v642 = vunpack.c.l.b16 %v364
    %v643 = vunpack.c.h.b16 %v364
    %v644 = vunpack.c.l.b16 %v365
    %v645 = vunpack.c.l.b16 %v366
    %v646 = vunpack.c.h.b16 %v366
    %v647 = vunpack.c.l.b16 %v367
    %v648 = vunpack.c.l.b16 %v368
    %v649 = vunpack.c.h.b16 %v368
    %v650 = vunpack.c.l.b16 %v369
    %v651 = vunpack.c.l.b16 %v370
    %v652 = vunpack.c.h.b16 %v370
    %v653 = vunpack.c.l.b16 %v371
    %v654 = vunpack.c.l.b16 %v372
    %v655 = vunpack.c.h.b16 %v372
    %v656 = vunpack.c.l.b16 %v373
    %v657 = vunpack.c.l.b16 %v374
    %v658 = vunpack.c.h.b16 %v374
    %v659 = vunpack.c.l.b16 %v375
    %v660 = vunpack.c.l.b16 %v376
    %v661 = vunpack.c.h.b16 %v376
    %v662 = vunpack.c.l.b16 %v377
    %v663 = vunpack.c.l.b16 %v378
    %v664 = vunpack.c.h.b16 %v378
    %v665 = vunpack.c.l.b16 %v379
    %v666 = vunpack.c.l.b16 %v380
    %v667 = vunpack.c.h.b16 %v380
    %v668 = vunpack.c.l.b16 %v381
    %v669 = vunpack.c.l.b16 %v382
    %v670 = vunpack.c.h.b16 %v382
    %v671 = vunpack.c.l.b16 %v383
    %v672 = vunpack.c.l.b16 %v384
    %v673 = vunpack.c.h.b16 %v384
    %v674 = vunpack.c.l.b16 %v385
    %v675 = vunpack.c.l.b16 %v386
    %v676 = vunpack.c.h.b16 %v386
    %v677 = vunpack.c.l.b16 %v387
    %v678 = vunpack.c.l.b16 %v388
    %v679 = vunpack.c.h.b16 %v388
    %v680 = vunpack.c.l.b16 %v389
    %v681 = vunpack.c.l.b16 %v390
    %v682 = vunpack.c.h.b16 %v390
    %v683 = vunpack.c.l.b16 %v391
    %v684 = vunpack.c.l.b16 %v392
    %v685 = vunpack.c.h.b16 %v392
    %v686 = vunpack.c.l.b16 %v393
    %v687 = vunpack.c.l.b16 %v394
    %v688 = vunpack.c.h.b16 %v394
    %v689 = vunpack.c.l.b16 %v395
    %v690 = vunpack.c.l.b16 %v396
    %v691 = vunpack.c.h.b16 %v396
    %v692 = vunpack.c.l.b16 %v397
    %v693 = vunpack.c.l.b16 %v398
    %v694 = vunpack.c.h.b16 %v398
    %v695 = vunpack.c.l.b16 %v399
    %v696 = vunpack.c.l.b16 %v400
    %v697 = vunpack.c.h.b16 %v400
    %v698 = vunpack.c.l.b16 %v401
    %v699 = vunpack.c.l.b16 %v402
    %v700 = vunpack.c.h.b16 %v402
    %v701 = vunpack.c.l.b16 %v403
    %v702 = vunpack.c.l.b16 %v404
    %v703 = vunpack.c.h.b16 %v404
    %v704 = vunpack.c.l.b16 %v405
    %v705 = vunpack.c.l.b16 %v406
    %v706 = vunpack.c.h.b16 %v406
    %v707 = vunpack.c.l.b16 %v407
    %v708 = vunpack.c.l.b16 %v408
    %v709 = vunpack.c.h.b16 %v408
    %v710 = vunpack.c.l.b16 %v409
    %v711 = vunpack.c.l.b16 %v410
    %v712 = vunpack.c.h.b16 %v410
    %v713 = vunpack.c.l.b16 %v411
    %v714 = vunpack.c.l.b16 %v412
    %v715 = vunpack.c.h.b16 %v412
    %v716 = vunpack.c.l.b16 %v413
    %v717 = vunpack.c.l.b16 %v414
    %v718 = vunpack.c.h.b16 %v414
    %v719 = vunpack.c.l.b16 %v415
    %v720 = vunpack.c.l.b16 %v416
    %v721 = vunpack.c.h.b16 %v416
    %v722 = vunpack.c.l.b16 %v417
    %v723 = vunpack.c.l.b16 %v418
    %v724 = vunpack.c.h.b16 %v418
    %v725 = vunpack.c.l.b16 %v419
    %v726 = vunpack.c.l.b16 %v420
    %v727 = vunpack.c.h.b16 %v420
    %v728 = vunpack.c.l.b16 %v421
    %v729 = vunpack.c.l.b16 %v422
    %v730 = vunpack.c.h.b16 %v422
    %v731 = vunpack.c.l.b16 %v423
    %v732 = vunpack.c.l.b16 %v424
    %v733 = vunpack.c.h.b16 %v424
    %v734 = vunpack.c.l.b16 %v425
    %v735 = vunpack.c.l.b16 %v426
    %v736 = vunpack.c.h.b16 %v426
    %v737 = vunpack.c.l.b16 %v427
    %v738 = vunpack.c.l.b16 %v428
    %v739 = vunpack.c.h.b16 %v428
    %v740 = vunpack.c.l.b16 %v429
    %v741 = vunpack.c.l.b16 %v430
    %v742 = vunpack.c.h.b16 %v430
    %v743 = vunpack.c.l.b16 %v431
    %v744 = vunpack.c.l.b16 %v432
    %v745 = vunpack.c.h.b16 %v432
    %v746 = vunpack.c.l.b16 %v433
    %v747 = vunpack.c.l.b16 %v434
    %v748 = vunpack.c.h.b16 %v434
    %v749 = vunpack.c.l.b16 %v435
    %v750 = vunpack.c.l.b16 %v436
    %v751 = vunpack.c.h.b16 %v436
    %v752 = vunpack.c.l.b16 %v437
    %v753 = vunpack.c.l.b16 %v438
    %v754 = vunpack.c.h.b16 %v438
    %v755 = vunpack.c.l.b16 %v439
    %v756 = vunpack.c.l.b16 %v440
    %v757 = vunpack.c.h.b16 %v440
    %v758 = vunpack.c.l.b16 %v441
    %v759 = vunpack.c.l.b16 %v442
    %v760 = vunpack.c.h.b16 %v442
    %v761 = vunpack.c.l.b16 %v443
    %v762 = vunpack.c.l.b16 %v444
    %v763 = vunpack.c.h.b16 %v444
    %v764 = vunpack.c.l.b16 %v445
    %v765 = vunpack.c.l.b16 %v446
    %v766 = vunpack.c.h.b16 %v446
    %v767 = vunpack.c.l.b16 %v447
    %v768 = vunpack.c.l.b16 %v448
    %v769 = vunpack.c.h.b16 %v448
    %v770 = vunpack.c.l.b16 %v449
    %v771 = vunpack.c.l.b16 %v450
    %v772 = vunpack.c.h.b16 %v450
    %v773 = vunpack.c.l.b16 %v451
    %v774 = vunpack.c.l.b16 %v452
    %v775 = vunpack.c.h.b16 %v452
    %v776 = vunpack.c.l.b16 %v453
    %v777 = vunpack.c.l.b16 %v454
    %v778 = vunpack.c.h.b16 %v454
    %v779 = vunpack.c.l.b16 %v455
    %v780 = vunpack.c.l.b16 %v456
    %v781 = vunpack.c.h.b16 %v456
    %v782 = vunpack.c.l.b16 %v457
    %v783 = vunpack.c.l.b16 %v458
    %v784 = vunpack.c.h.b16 %v458
    %v785 = vunpack.c.l.b16 %v459
    %v786 = vunpack.c.l.b16 %v460
    %v787 = vunpack.c.h.b16 %v460
    %v788 = vunpack.c.l.b16 %v461
    %v789 = vunpack.c.l.b16 %v462
    %v790 = vunpack.c.h.b16 %v462
    %v791 = vunpack.c.l.b16 %v463
    %v792 = vpack.c.b16 %v603, %v600
    %v793 = vpack.c.b16 %v604, %v601
    %v794 = vpack.c.b16 %v605, %v602
    %v795 = vpack.c.b16 %v609, %v606
    %v796 = vpack.c.b16 %v610, %v607
    %v797 = vpack.c.b16 %v611, %v608
    %v798 = vpack.c.b16 %v615, %v612
    %v799 = vpack.c.b16 %v616, %v613
    %v800 = vpack.c.b16 %v617, %v614
    %v801 = vpack.c.b16 %v621, %v618
    %v802 = vpack.c.b16 %v622, %v619
    %v803 = vpack.c.b16 %v623, %v620
    %v804 = vpack.c.b16 %v627, %v624
    %v805 = vpack.c.b16 %v628, %v625
    %v806 = vpack.c.b16 %v629, %v626
    %v807 = vpack.c.b16 %v633, %v630
    %v808 = vpack.c.b16 %v634, %v631
    %v809 = vpack.c.b16 %v635, %v632
    %v810 = vpack.c.b16 %v639, %v636
    %v811 = vpack.c.b16 %v640, %v637
    %v812 = vpack.c.b16 %v641, %v638
    %v813 = vpack.c.b16 %v645, %v642
    %v814 = vpack.c.b16 %v646, %v643
    %v815 = vpack.c.b16 %v647, %v644
    %v816 = vpack.c.b16 %v651, %v648
    %v817 = vpack.c.b16 %v652, %v649
    %v818 = vpack.c.b16 %v653, %v650
    %v819 = vpack.c.b16 %v657, %v654
    %v820 = vpack.c.b16 %v658, %v655
    %v821 = vpack.c.b16 %v659, %v656
    %v822 = vpack.c.b16 %v663, %v660
    %v823 = vpack.c.b16 %v664, %v661
    %v824 = vpack.c.b16 %v665, %v662
    %v825 = vpack.c.b16 %v669, %v666
    %v826 = vpack.c.b16 %v670, %v667
    %v827 = vpack.c.b16 %v671, %v668
    %v828 = vpack.c.b16 %v675, %v672
    %v829 = vpack.c.b16 %v676, %v673
    %v830 = vpack.c.b16 %v677, %v674
    %v831 = vpack.c.b16 %v681, %v678
    %v832 = vpack.c.b16 %v682, %v679
    %v833 = vpack.c.b16 %v683, %v680
    %v834 = vpack.c.b16 %v687, %v684
    %v835 = vpack.c.b16 %v688, %v685
    %v836 = vpack.c.b16 %v689, %v686
    %v837 = vpack.c.b16 %v693, %v690
    %v838 = vpack.c.b16 %v694, %v691
    %v839 = vpack.c.b16 %v695, %v692
    %v840 = vpack.c.b16 %v699, %v696
    %v841 = vpack.c.b16 %v700, %v697
    %v842 = vpack.c.b16 %v701, %v698
    %v843 = vpack.c.b16 %v705, %v702
    %v844 = vpack.c.b16 %v706, %v703
    %v845 = vpack.c.b16 %v707, %v704
    %v846 = vpack.c.b16 %v711, %v708
    %v847 = vpack.c.b16 %v712, %v709
    %v848 = vpack.c.b16 %v713, %v710
    %v849 = vpack.c.b16 %v717, %v714
    %v850 = vpack.c.b16 %v718, %v715
    %v851 = vpack.c.b16 %v719, %v716
    %v852 = vpack.c.b16 %v723, %v720
    %v853 = vpack.c.b16 %v724, %v721
    %v854 = vpack.c.b16 %v725, %v722
    %v855 = vpack.c.b16 %v729, %v726
    %v856 = vpack.c.b16 %v730, %v727
    %v857 = vpack.c.b16 %v731, %v728
    %v858 = vpack.c.b16 %v735, %v732
    %v859 = vpack.c.b16 %v736, %v733
    %v860 = vpack.c.b16 %v737, %v734
    %v861 = vpack.c.b16 %v741, %v738
    %v862 = vpack.c.b16 %v742, %v739
    %v863 = vpack.c.b16 %v743, %v740
    %v864 = vpack.c.b16 %v747, %v744
    %v865 = vpack.c.b16 %v748, %v745
    %v866 = vpack.c.b16 %v749, %v746
    %v867 = vpack.c.b16 %v753, %v750
    %v868 = vpack.c.b16 %v754, %v751
    %v869 = vpack.c.b16 %v755, %v752
    %v870 = vpack.c.b16 %v759, %v756
    %v871 = vpack.c.b16 %v760, %v757
    %v872 = vpack.c.b16 %v761, %v758
    %v873 = vpack.c.b16 %v765, %v762
    %v874 = vpack.c.b16 %v766, %v763
    %v875 = vpack.c.b16 %v767, %v764
    %v876 = vpack.c.b16 %v771, %v768
    %v877 = vpack.c.b16 %v772, %v769
    %v878 = vpack.c.b16 %v773, %v770
    %v879 = vpack.c.b16 %v777, %v774
    %v880 = vpack.c.b16 %v778, %v775
    %v881 = vpack.c.b16 %v779, %v776
    %v882 = vpack.c.b16 %v783, %v780
    %v883 = vpack.c.b16 %v784, %v781
    %v884 = vpack.c.b16 %v785, %v782
    %v885 = vpack.c.b16 %v789, %v786
    %v886 = vpack.c.b16 %v790, %v787
    %v887 = vpack.c.b16 %v791, %v788
    %984 = vmatpush.bf16.msra.mxu0 %v813
    %985 = vmatpush.bf16.msra.mxu0 %v810
    %986 = vmatpush.bf16.msra.mxu0 %v807
    %987 = vmatpush.bf16.msra.mxu0 %v804
    %988 = vmatpush.bf16.msra.mxu0 %v801
    %989 = vmatpush.bf16.msra.mxu0 %v798
    %990 = vmatpush.bf16.msra.mxu0 %v795
    %991 = vmatpush.bf16.msra.mxu0 %v792
    %992 = vmatmul.bf16.gmra.mxu0 %v332
    %v993 = vpop.f32.mrf.mxu0
    %v994 = vadd.f32 %v466, %v993
    %v995 = vpop.f32.mrf.mxu0
    %996 = vdwg.mxu0
    %997 = vmatpush.bf16.msra.mxu0 %v837
    %998 = vmatpush.bf16.msra.mxu0 %v834
    %999 = vmatpush.bf16.msra.mxu0 %v831
    %1000 = vmatpush.bf16.msra.mxu0 %v828
    %1001 = vmatpush.bf16.msra.mxu0 %v825
    %1002 = vmatpush.bf16.msra.mxu0 %v822
    %1003 = vmatpush.bf16.msra.mxu0 %v819
    %1004 = vmatpush.bf16.msra.mxu0 %v816
    %1005 = vmatmul.bf16.gmra.mxu0 %v333
    %v1006 = vpop.f32.mrf.mxu0
    %v1007 = vadd.f32 %v994, %v1006
    %v1008 = vpop.f32.mrf.mxu0
    %1009 = vdwg.mxu0
    %1010 = vmatpush.bf16.msra.mxu0 %v861
    %1011 = vmatpush.bf16.msra.mxu0 %v858
    %1012 = vmatpush.bf16.msra.mxu0 %v855
    %1013 = vmatpush.bf16.msra.mxu0 %v852
    %1014 = vmatpush.bf16.msra.mxu0 %v849
    %1015 = vmatpush.bf16.msra.mxu0 %v846
    %1016 = vmatpush.bf16.msra.mxu0 %v843
    %1017 = vmatpush.bf16.msra.mxu0 %v840
    %1018 = vmatmul.bf16.gmra.mxu0 %v334
    %v1019 = vpop.f32.mrf.mxu0
    %v1020 = vadd.f32 %v1007, %v1019
    %v1021 = vpop.f32.mrf.mxu0
    %1022 = vdwg.mxu0
    %1023 = vmatpush.bf16.msra.mxu0 %v885
    %1024 = vmatpush.bf16.msra.mxu0 %v882
    %1025 = vmatpush.bf16.msra.mxu0 %v879
    %1026 = vmatpush.bf16.msra.mxu0 %v876
    %1027 = vmatpush.bf16.msra.mxu0 %v873
    %1028 = vmatpush.bf16.msra.mxu0 %v870
    %1029 = vmatpush.bf16.msra.mxu0 %v867
    %1030 = vmatpush.bf16.msra.mxu0 %v864
    %1031 = vmatmul.bf16.gmra.mxu0 %v335
    %v1032 = vpop.f32.mrf.mxu0
    %v1033 = vadd.f32 %v1020, %v1032
    %v1034 = vpop.f32.mrf.mxu0
    %1035 = vdwg.mxu0
    %1036 = vmatpush.bf16.msra.mxu0 %v814
    %1037 = vmatpush.bf16.msra.mxu0 %v811
    %1038 = vmatpush.bf16.msra.mxu0 %v808
    %1039 = vmatpush.bf16.msra.mxu0 %v805
    %1040 = vmatpush.bf16.msra.mxu0 %v802
    %1041 = vmatpush.bf16.msra.mxu0 %v799
    %1042 = vmatpush.bf16.msra.mxu0 %v796
    %1043 = vmatpush.bf16.msra.mxu0 %v793
    %1044 = vmatmul.bf16.gmra.mxu0 %v332
    %v1045 = vpop.f32.mrf.mxu0
    %v1046 = vadd.f32 %v467, %v1045
    %v1047 = vpop.f32.mrf.mxu0
    %1048 = vdwg.mxu0
    %1049 = vmatpush.bf16.msra.mxu0 %v838
    %1050 = vmatpush.bf16.msra.mxu0 %v835
    %1051 = vmatpush.bf16.msra.mxu0 %v832
    %1052 = vmatpush.bf16.msra.mxu0 %v829
    %1053 = vmatpush.bf16.msra.mxu0 %v826
    %1054 = vmatpush.bf16.msra.mxu0 %v823
    %1055 = vmatpush.bf16.msra.mxu0 %v820
    %1056 = vmatpush.bf16.msra.mxu0 %v817
    %1057 = vmatmul.bf16.gmra.mxu0 %v333
    %v1058 = vpop.f32.mrf.mxu0
    %v1059 = vadd.f32 %v1046, %v1058
    %v1060 = vpop.f32.mrf.mxu0
    %1061 = vdwg.mxu0
    %1062 = vmatpush.bf16.msra.mxu0 %v862
    %1063 = vmatpush.bf16.msra.mxu0 %v859
    %1064 = vmatpush.bf16.msra.mxu0 %v856
    %1065 = vmatpush.bf16.msra.mxu0 %v853
    %1066 = vmatpush.bf16.msra.mxu0 %v850
    %1067 = vmatpush.bf16.msra.mxu0 %v847
    %1068 = vmatpush.bf16.msra.mxu0 %v844
    %1069 = vmatpush.bf16.msra.mxu0 %v841
    %1070 = vmatmul.bf16.gmra.mxu0 %v334
    %v1071 = vpop.f32.mrf.mxu0
    %v1072 = vadd.f32 %v1059, %v1071
    %v1073 = vpop.f32.mrf.mxu0
    %1074 = vdwg.mxu0
    %1075 = vmatpush.bf16.msra.mxu0 %v886
    %1076 = vmatpush.bf16.msra.mxu0 %v883
    %1077 = vmatpush.bf16.msra.mxu0 %v880
    %1078 = vmatpush.bf16.msra.mxu0 %v877
    %1079 = vmatpush.bf16.msra.mxu0 %v874
    %1080 = vmatpush.bf16.msra.mxu0 %v871
    %1081 = vmatpush.bf16.msra.mxu0 %v868
    %1082 = vmatpush.bf16.msra.mxu0 %v865
    %1083 = vmatmul.bf16.gmra.mxu0 %v335
    %v1084 = vpop.f32.mrf.mxu0
    %v1085 = vadd.f32 %v1072, %v1084
    %v1086 = vpop.f32.mrf.mxu0
    %1087 = vdwg.mxu0
    %1088 = vmatpush.bf16.msra.mxu0 %v815
    %1089 = vmatpush.bf16.msra.mxu0 %v812
    %1090 = vmatpush.bf16.msra.mxu0 %v809
    %1091 = vmatpush.bf16.msra.mxu0 %v806
    %1092 = vmatpush.bf16.msra.mxu0 %v803
    %1093 = vmatpush.bf16.msra.mxu0 %v800
    %1094 = vmatpush.bf16.msra.mxu0 %v797
    %1095 = vmatpush.bf16.msra.mxu0 %v794
    %1096 = vmatmul.bf16.gmra.mxu0 %v332
    %v1097 = vpop.f32.mrf.mxu0
    %v1098 = vadd.f32 %v468, %v1097
    %v1099 = vpop.f32.mrf.mxu0
    %1100 = vdwg.mxu0
    %1101 = vmatpush.bf16.msra.mxu0 %v839
    %1102 = vmatpush.bf16.msra.mxu0 %v836
    %1103 = vmatpush.bf16.msra.mxu0 %v833
    %1104 = vmatpush.bf16.msra.mxu0 %v830
    %1105 = vmatpush.bf16.msra.mxu0 %v827
    %1106 = vmatpush.bf16.msra.mxu0 %v824
    %1107 = vmatpush.bf16.msra.mxu0 %v821
    %1108 = vmatpush.bf16.msra.mxu0 %v818
    %1109 = vmatmul.bf16.gmra.mxu0 %v333
    %v1110 = vpop.f32.mrf.mxu0
    %v1111 = vadd.f32 %v1098, %v1110
    %v1112 = vpop.f32.mrf.mxu0
    %1113 = vdwg.mxu0
    %1114 = vmatpush.bf16.msra.mxu0 %v863
    %1115 = vmatpush.bf16.msra.mxu0 %v860
    %1116 = vmatpush.bf16.msra.mxu0 %v857
    %1117 = vmatpush.bf16.msra.mxu0 %v854
    %1118 = vmatpush.bf16.msra.mxu0 %v851
    %1119 = vmatpush.bf16.msra.mxu0 %v848
    %1120 = vmatpush.bf16.msra.mxu0 %v845
    %1121 = vmatpush.bf16.msra.mxu0 %v842
    %1122 = vmatmul.bf16.gmra.mxu0 %v334
    %v1123 = vpop.f32.mrf.mxu0
    %v1124 = vadd.f32 %v1111, %v1123
    %v1125 = vpop.f32.mrf.mxu0
    %1126 = vdwg.mxu0
    %1127 = vmatpush.bf16.msra.mxu0 %v887
    %1128 = vmatpush.bf16.msra.mxu0 %v884
    %1129 = vmatpush.bf16.msra.mxu0 %v881
    %1130 = vmatpush.bf16.msra.mxu0 %v878
    %1131 = vmatpush.bf16.msra.mxu0 %v875
    %1132 = vmatpush.bf16.msra.mxu0 %v872
    %1133 = vmatpush.bf16.msra.mxu0 %v869
    %1134 = vmatpush.bf16.msra.mxu0 %v866
    %1135 = vmatmul.bf16.gmra.mxu0 %v335
    %v1136 = vpop.f32.mrf.mxu0
    %v1137 = vadd.f32 %v1124, %v1136
    %v1138 = vpop.f32.mrf.mxu0
    %1139 = vdwg.mxu0
    %v1140 = vmax.f32 %v1033, 0.0
    %v1141 = vmax.f32 %v1085, 0.0
    %v1142 = vmax.f32 %v1137, 0.0
    %v1143 = vpack.c.bf16 %v1140, %v1140
    %v1144 = vpack.c.bf16 %v1141, %v1141
    %v1145 = vpack.c.bf16 %v1142, %v1142
    %v1146 = vld [vmem:[#allocation6] sm:$0xf]
    %v1147 = vld [vmem:[#allocation6 + $0x4] sm:$0xf]
    %v1148 = vld [vmem:[#allocation6 + $0x8] sm:$0xf]
    %v1149 = vld [vmem:[#allocation6 + $0xc] sm:$0xf]
    %v1150 = vld [vmem:[#allocation6 + $0x10] sm:$0xf]
    %v1151 = vld [vmem:[#allocation6 + $0x14] sm:$0xf]
    %v1152 = vld [vmem:[#allocation6 + $0x18] sm:$0xf]
    %v1153 = vld [vmem:[#allocation6 + $0x1c] sm:$0xf]
    %v1154 = vld [vmem:[#allocation6 + $0x20] sm:$0xf]
    %v1155 = vld [vmem:[#allocation6 + $0x24] sm:$0xf]
    %v1156 = vld [vmem:[#allocation6 + $0x28] sm:$0xf]
    %v1157 = vld [vmem:[#allocation6 + $0x2c] sm:$0xf]
    %v1158 = vld [vmem:[#allocation6 + $0x30] sm:$0xf]
    %v1159 = vld [vmem:[#allocation6 + $0x34] sm:$0xf]
    %v1160 = vld [vmem:[#allocation6 + $0x38] sm:$0xf]
    %v1161 = vld [vmem:[#allocation6 + $0x3c] sm:$0xf]
    %v1162 = vld [vmem:[#allocation6 + $0x40] sm:$0xf]
    %v1163 = vld [vmem:[#allocation6 + $0x44] sm:$0xf]
    %v1164 = vld [vmem:[#allocation6 + $0x48] sm:$0xf]
    %v1165 = vld [vmem:[#allocation6 + $0x4c] sm:$0xf]
    %v1166 = vld [vmem:[#allocation6 + $0x50] sm:$0xf]
    %v1167 = vld [vmem:[#allocation6 + $0x54] sm:$0xf]
    %v1168 = vld [vmem:[#allocation6 + $0x58] sm:$0xf]
    %v1169 = vld [vmem:[#allocation6 + $0x5c] sm:$0xf]
    %v1170 = vld [vmem:[#allocation6 + $0x60] sm:$0xf]
    %v1171 = vld [vmem:[#allocation6 + $0x64] sm:$0xf]
    %v1172 = vld [vmem:[#allocation6 + $0x68] sm:$0xf]
    %v1173 = vld [vmem:[#allocation6 + $0x6c] sm:$0xf]
    %v1174 = vld [vmem:[#allocation6 + $0x70] sm:$0xf]
    %v1175 = vld [vmem:[#allocation6 + $0x74] sm:$0xf]
    %v1176 = vld [vmem:[#allocation6 + $0x78] sm:$0xf]
    %v1177 = vld [vmem:[#allocation6 + $0x7c] sm:$0xf]
    %v1178 = vld [vmem:[#allocation6 + $0x80] sm:$0xf]
    %v1179 = vld [vmem:[#allocation6 + $0x84] sm:$0xf]
    %v1180 = vld [vmem:[#allocation6 + $0x88] sm:$0xf]
    %v1181 = vld [vmem:[#allocation6 + $0x8c] sm:$0xf]
    %v1182 = vld [vmem:[#allocation6 + $0x90] sm:$0xf]
    %v1183 = vld [vmem:[#allocation6 + $0x94] sm:$0xf]
    %v1184 = vld [vmem:[#allocation6 + $0x98] sm:$0xf]
    %v1185 = vld [vmem:[#allocation6 + $0x9c] sm:$0xf]
    %v1186 = vld [vmem:[#allocation6 + $0xa0] sm:$0xf]
    %v1187 = vld [vmem:[#allocation6 + $0xa4] sm:$0xf]
    %v1188 = vld [vmem:[#allocation6 + $0xa8] sm:$0xf]
    %v1189 = vld [vmem:[#allocation6 + $0xac] sm:$0xf]
    %v1190 = vld [vmem:[#allocation6 + $0xb0] sm:$0xf]
    %v1191 = vld [vmem:[#allocation6 + $0xb4] sm:$0xf]
    %v1192 = vld [vmem:[#allocation6 + $0xb8] sm:$0xf]
    %v1193 = vld [vmem:[#allocation6 + $0xbc] sm:$0xf]
    %v1194 = vld [vmem:[%s6] sm:$0x1]
    %v1196 = vperm.slane %v1194, 0
    %v1246 = vunpack.c.l.b16 %v1146
    %v1247 = vunpack.c.l.b16 %v1147
    %v1248 = vunpack.c.l.b16 %v1148
    %v1249 = vunpack.c.l.b16 %v1149
    %v1250 = vunpack.c.l.b16 %v1150
    %v1251 = vunpack.c.l.b16 %v1151
    %v1252 = vunpack.c.l.b16 %v1152
    %v1253 = vunpack.c.l.b16 %v1153
    %v1254 = vunpack.c.l.b16 %v1154
    %v1255 = vunpack.c.l.b16 %v1155
    %v1256 = vunpack.c.l.b16 %v1156
    %v1257 = vunpack.c.l.b16 %v1157
    %v1258 = vunpack.c.l.b16 %v1158
    %v1259 = vunpack.c.l.b16 %v1159
    %v1260 = vunpack.c.l.b16 %v1160
    %v1261 = vunpack.c.l.b16 %v1161
    %v1262 = vunpack.c.l.b16 %v1162
    %v1263 = vunpack.c.l.b16 %v1163
    %v1264 = vunpack.c.l.b16 %v1164
    %v1265 = vunpack.c.l.b16 %v1165
    %v1266 = vunpack.c.l.b16 %v1166
    %v1267 = vunpack.c.l.b16 %v1167
    %v1268 = vunpack.c.l.b16 %v1168
    %v1269 = vunpack.c.l.b16 %v1169
    %v1270 = vunpack.c.l.b16 %v1170
    %v1271 = vunpack.c.l.b16 %v1171
    %v1272 = vunpack.c.l.b16 %v1172
    %v1273 = vunpack.c.l.b16 %v1173
    %v1274 = vunpack.c.l.b16 %v1174
    %v1275 = vunpack.c.l.b16 %v1175
    %v1276 = vunpack.c.l.b16 %v1176
    %v1277 = vunpack.c.l.b16 %v1177
    %v1278 = vunpack.c.l.b16 %v1178
    %v1279 = vunpack.c.l.b16 %v1179
    %v1280 = vunpack.c.l.b16 %v1180
    %v1281 = vunpack.c.l.b16 %v1181
    %v1282 = vunpack.c.l.b16 %v1182
    %v1283 = vunpack.c.l.b16 %v1183
    %v1284 = vunpack.c.l.b16 %v1184
    %v1285 = vunpack.c.l.b16 %v1185
    %v1286 = vunpack.c.l.b16 %v1186
    %v1287 = vunpack.c.l.b16 %v1187
    %v1288 = vunpack.c.l.b16 %v1188
    %v1289 = vunpack.c.l.b16 %v1189
    %v1290 = vunpack.c.l.b16 %v1190
    %v1291 = vunpack.c.l.b16 %v1191
    %v1292 = vunpack.c.l.b16 %v1192
    %v1293 = vunpack.c.l.b16 %v1193
    %v1294 = vpack.c.b16 %v1247, %v1246
    %v1295 = vpack.c.b16 %v1249, %v1248
    %v1296 = vpack.c.b16 %v1251, %v1250
    %v1297 = vpack.c.b16 %v1253, %v1252
    %v1298 = vpack.c.b16 %v1255, %v1254
    %v1299 = vpack.c.b16 %v1257, %v1256
    %v1300 = vpack.c.b16 %v1259, %v1258
    %v1301 = vpack.c.b16 %v1261, %v1260
    %v1302 = vpack.c.b16 %v1263, %v1262
    %v1303 = vpack.c.b16 %v1265, %v1264
    %v1304 = vpack.c.b16 %v1267, %v1266
    %v1305 = vpack.c.b16 %v1269, %v1268
    %v1306 = vpack.c.b16 %v1271, %v1270
    %v1307 = vpack.c.b16 %v1273, %v1272
    %v1308 = vpack.c.b16 %v1275, %v1274
    %v1309 = vpack.c.b16 %v1277, %v1276
    %v1310 = vpack.c.b16 %v1279, %v1278
    %v1311 = vpack.c.b16 %v1281, %v1280
    %v1312 = vpack.c.b16 %v1283, %v1282
    %v1313 = vpack.c.b16 %v1285, %v1284
    %v1314 = vpack.c.b16 %v1287, %v1286
    %v1315 = vpack.c.b16 %v1289, %v1288
    %v1316 = vpack.c.b16 %v1291, %v1290
    %v1317 = vpack.c.b16 %v1293, %v1292
    %1342 = vmatpush.bf16.msra.mxu0 %v1301
    %1343 = vmatpush.bf16.msra.mxu0 %v1300
    %1344 = vmatpush.bf16.msra.mxu0 %v1299
    %1345 = vmatpush.bf16.msra.mxu0 %v1298
    %1346 = vmatpush.bf16.msra.mxu0 %v1297
    %1347 = vmatpush.bf16.msra.mxu0 %v1296
    %1348 = vmatpush.bf16.msra.mxu0 %v1295
    %1349 = vmatpush.bf16.msra.mxu0 %v1294
    %1350 = vmatmul.bf16.gmra.mxu0 %v1143
    %v1351 = vpop.f32.mrf.mxu0
    %v1352 = vadd.f32 %v1196, %v1351
    %v1353 = vpop.f32.mrf.mxu0
    %1354 = vdwg.mxu0
    %1355 = vmatpush.bf16.msra.mxu0 %v1309
    %1356 = vmatpush.bf16.msra.mxu0 %v1308
    %1357 = vmatpush.bf16.msra.mxu0 %v1307
    %1358 = vmatpush.bf16.msra.mxu0 %v1306
    %1359 = vmatpush.bf16.msra.mxu0 %v1305
    %1360 = vmatpush.bf16.msra.mxu0 %v1304
    %1361 = vmatpush.bf16.msra.mxu0 %v1303
    %1362 = vmatpush.bf16.msra.mxu0 %v1302
    %1363 = vmatmul.bf16.gmra.mxu0 %v1144
    %v1364 = vpop.f32.mrf.mxu0
    %v1365 = vadd.f32 %v1352, %v1364
    %v1366 = vpop.f32.mrf.mxu0
    %1367 = vdwg.mxu0
    %1368 = vmatpush.bf16.msra.mxu0 %v1317
    %1369 = vmatpush.bf16.msra.mxu0 %v1316
    %1370 = vmatpush.bf16.msra.mxu0 %v1315
    %1371 = vmatpush.bf16.msra.mxu0 %v1314
    %1372 = vmatpush.bf16.msra.mxu0 %v1313
    %1373 = vmatpush.bf16.msra.mxu0 %v1312
    %1374 = vmatpush.bf16.msra.mxu0 %v1311
    %1375 = vmatpush.bf16.msra.mxu0 %v1310
    %1376 = vmatmul.bf16.gmra.mxu0 %v1145
    %v1377 = vpop.f32.mrf.mxu0
    %v1378 = vadd.f32 %v1365, %v1377
    %v1379 = vpop.f32.mrf.mxu0
    %1380 = vdwg.mxu0
    %v1381 = vtanh.pop %v1378
    %1382 = vst [vmem:[%s7] sm:$0xff] %v1381
    // Predicated region
    $region42: #{actor_forward.1} parent=1 // pred_check
      _
    $region43: #{actor_forward.1} parent=1 // pred_check_branch
      %1384 = sbr.rel (0) target = $region45
    $region44: #{actor_forward.1} parent=1 // pred_region
      _
    $region45: #{actor_forward.1} parent=1 // pred_fallthru
      _
    // Predicated region
    $region46: #{actor_forward.1} parent=1 // pred_check
      _
    $region47: #{actor_forward.1} parent=1 // pred_check_branch
      %1386 = sbr.rel (0) target = $region49
    $region48: #{actor_forward.1} parent=1 // pred_region
      _
    $region49: #{actor_forward.1} parent=1 // pred_fallthru
      _
    %1387 = vsyncpa [#allocation3], 1
    %1388 = vsyncpa [#allocation5], 1

</llo_original>
